<compile_context>
chip_gen: v6e
topology: v6e:2x2x1
jax: 0.10.0
libtpu: 0.0.40
codegen_flags: <defaults>
</compile_context>

<pallas_src>
import jax
import jax.numpy as jnp
from jax.experimental import pallas as pl
from jax.experimental.pallas import tpu as pltpu


_MAX_LANE_COLS = 4096                  # search cap for the lane-dense last dim
_TILE_BYTES = 4 * 1024 * 1024          # per-buffer tile target (4 MiB)
_VMEM_LIMIT_BYTES = 56 * 1024 * 1024   # 6 streams x 2 bufs x 4 MiB + headroom
_MIN_PALLAS_ELEMENTS = 1 << 20         # below this, plain XLA fusion wins


def _make_fusion_kernel(a12, a10, a21, a23):
    """Elementwise kernel; keeps PyTorch's 0.5 * (a*x - b*y) rounding order."""
    def kernel(f10_ref, f12_ref, f21_ref, f23_ref, o0_ref, o1_ref):
        o0_ref[...] = 0.5 * (a12 * f12_ref[...] - a10 * f10_ref[...])
        o1_ref[...] = 0.5 * (a21 * f21_ref[...] - a23 * f23_ref[...])
    return kernel


def ac_fusion_layer_ref(flo10, flo12, flo21, flo23, t=0.5):
    """Pure-JAX reference matching the PyTorch forward exactly."""
    return (
        0.5 * ((t + t ** 2) * flo12 - (t - t ** 2) * flo10),
        0.5 * ((1 - t + (1 - t) ** 2) * flo21 - (1 - t - (1 - t) ** 2) * flo23),
    )


def _find_lane_cols(total, max_cols=_MAX_LANE_COLS):
    """Largest multiple of 128 that divides `total` (<= max_cols), else None.

    A reshape of the contiguous row-major NCHW volume to (total//cols, cols)
    is a bitcast, so this gives a lane-dense layout with zero HBM traffic.
    """
    if total % 128 != 0:
        return None
    best = None
    c = 128
    limit = min(total, max_cols)
    while c <= limit:
        if total % c == 0:
            best = c
        c += 128
    return best


def ac_fusion_layer(flo10, flo12, flo21, flo23, t=0.5, *,
                    min_pallas_elements=_MIN_PALLAS_ELEMENTS,
                    tile_rows=None):
    """JAX/Pallas equivalent of AcFusionLayer.forward.

    All four flows must share shape/dtype (NCHW). `t` is a static Python float
    (as in the PyTorch default argument).  For best memory behaviour, donate
    flo12 / flo21 (do not reuse them after the call) so the output aliasing
    actually takes effect.
    """
    assert flo10.shape == flo12.shape == flo21.shape == flo23.shape
    assert flo10.dtype == flo12.dtype == flo21.dtype == flo23.dtype

    shape = flo10.shape
    dtype = flo10.dtype
    total = int(flo10.size)

    # Tiny inputs: custom-call + DMA setup overhead dwarfs a few vregs of work.
    if total < min_pallas_elements and tile_rows is None:
        return ac_fusion_layer_ref(flo10, flo12, flo21, flo23, t)

    cols = _find_lane_cols(total)
    if cols is None:
        # No zero-copy lane-dense factorization (total not a multiple of 128).
        # Pure-JAX fallback moves exactly the 6N bytes the op requires, which
        # beats any pad/slice wrapper around a Pallas call.
        return ac_fusion_layer_ref(flo10, flo12, flo21, flo23, t)

    rows = total // cols
    itemsize = jnp.dtype(dtype).itemsize
    sublane = max(8, 32 // itemsize)          # 8 for f32, 16 for bf16

    if tile_rows is None:
        # Dtype-aware tile: keep ~_TILE_BYTES per buffer regardless of dtype.
        tile_rows = max(sublane,
                        (_TILE_BYTES // (cols * itemsize)) // sublane * sublane)
    else:
        # Round a user override up to the sublane multiple so the BlockSpec
        # satisfies the (8,128) lowering constraint.
        tile_rows = max(sublane, -(-int(tile_rows) // sublane) * sublane)
    tile_rows = min(tile_rows, rows)

    # Static Python scalar coefficients (PyTorch computes them in Python too).
    t = float(t)
    a12 = t + t ** 2
    a10 = t - t ** 2
    s = 1.0 - t
    a21 = s + s ** 2
    a23 = s - s ** 2

    # Zero-copy lane-dense reshape of the contiguous NCHW volume.
    x10, x12, x21, x23 = (x.reshape(rows, cols)
                          for x in (flo10, flo12, flo21, flo23))

    spec = pl.BlockSpec((tile_rows, cols), lambda i: (i, 0))

    out0, out1 = pl.pallas_call(
        _make_fusion_kernel(a12, a10, a21, a23),
        out_shape=(
            jax.ShapeDtypeStruct((rows, cols), dtype),
            jax.ShapeDtypeStruct((rows, cols), dtype),
        ),
        grid=(pl.cdiv(rows, tile_rows),),
        in_specs=[spec, spec, spec, spec],
        out_specs=(spec, spec),
        # Alias flo12 -> out0 and flo21 -> out1.  Effective only if the caller
        # donates / stops using flo12 & flo21; otherwise XLA inserts a copy
        # (correct either way).
        input_output_aliases={1: 0, 2: 1},
        compiler_params=pltpu.CompilerParams(
            dimension_semantics=("parallel",),
            vmem_limit_bytes=_VMEM_LIMIT_BYTES,
        ),
    )(x10, x12, x21, x23)

    return out0.reshape(shape), out1.reshape(shape)


if __name__ == "__main__":
    key = jax.random.PRNGKey(0)

    def make_flows(shape, dtype=jnp.float32):
        k10, k12, k21, k23 = jax.random.split(key, 4)
        return tuple(jax.random.normal(k, shape, dtype=dtype)
                     for k in (k10, k12, k21, k23))

    def check(shape, t, **kw):
        flows = make_flows(shape)
        # Force the Pallas path even for these small test shapes.
        o0, o1 = ac_fusion_layer(*flows, t=t, min_pallas_elements=0, **kw)
        o0 = jax.block_until_ready(o0)
        o1 = jax.block_until_ready(o1)
        r0, r1 = ac_fusion_layer_ref(*flows, t=t)
        assert o0.shape == shape and o1.shape == shape
        assert jnp.allclose(o0, r0, atol=1e-6, rtol=1e-6)
        assert jnp.allclose(o1, r1, atol=1e-6, rtol=1e-6)

    # 1) total == 1024: single (1, 1024) lane-dense block.
    check((2, 2, 16, 16), t=0.5)
    # 2) total == 7680: zero-copy reshape to (2, 3840) -- the shape that used
    #    to hit the pad/slice path now needs no extra HBM traffic.
    check((2, 2, 40, 48), t=0.3)
    # 3) Multi-block grid, even division (rows=16, tile_rows=8, grid=2).
    check((2, 2, 128, 128), t=0.5, tile_rows=8)
    # 4) Multi-block grid with a partial edge block (rows=12, tile_rows=8).
    check((2, 2, 96, 128), t=0.7, tile_rows=8)
    # 5) total not a multiple of 128: exercises the pure-JAX fallback path.
    check((2, 2, 15, 17), t=0.25)

    print("KERNEL_OK")
</pallas_src>

<mosaic_0001>
module attributes {stable_mosaic.version = 11 : i64} {
  func.func @kernel(%arg0: i32, %arg1: memref<1x1024xf32, #tpu.memory_space<vmem>>, %arg2: memref<1x1024xf32, #tpu.memory_space<vmem>>, %arg3: memref<1x1024xf32, #tpu.memory_space<vmem>>, %arg4: memref<1x1024xf32, #tpu.memory_space<vmem>>, %arg5: memref<1x1024xf32, #tpu.memory_space<vmem>>, %arg6: memref<1x1024xf32, #tpu.memory_space<vmem>>) attributes {dimension_semantics = [#tpu.dimension_semantics<parallel>], iteration_bounds = array<i64: 1>, scalar_prefetch = 0 : i64, scratch_operands = 0 : i64, tpu.core_type = #tpu.core_type<tc>, window_params = [{transform_indices = @transform_0, window_bounds = array<i64: 1, 1024>}, {transform_indices = @transform_1, window_bounds = array<i64: 1, 1024>}, {transform_indices = @transform_2, window_bounds = array<i64: 1, 1024>}, {transform_indices = @transform_3, window_bounds = array<i64: 1, 1024>}, {transform_indices = @transform_4, window_bounds = array<i64: 1, 1024>}, {transform_indices = @transform_5, window_bounds = array<i64: 1, 1024>}]} {
    %c0 = arith.constant 0 : index
    %c0_0 = arith.constant 0 : index
    %0 = vector.load %arg2[%c0, %c0_0] : memref<1x1024xf32, #tpu.memory_space<vmem>>, vector<1x1024xf32>
    %cst = arith.constant 7.500000e-01 : f32
    %1 = vector.broadcast %cst : f32 to vector<1x1024xf32>
    %2 = arith.mulf %1, %0 : vector<1x1024xf32>
    %c0_1 = arith.constant 0 : index
    %c0_2 = arith.constant 0 : index
    %3 = vector.load %arg1[%c0_1, %c0_2] : memref<1x1024xf32, #tpu.memory_space<vmem>>, vector<1x1024xf32>
    %cst_3 = arith.constant 2.500000e-01 : f32
    %4 = vector.broadcast %cst_3 : f32 to vector<1x1024xf32>
    %5 = arith.mulf %4, %3 : vector<1x1024xf32>
    %6 = arith.subf %2, %5 : vector<1x1024xf32>
    %cst_4 = arith.constant 5.000000e-01 : f32
    %7 = vector.broadcast %cst_4 : f32 to vector<1x1024xf32>
    %8 = arith.mulf %7, %6 : vector<1x1024xf32>
    %c0_5 = arith.constant 0 : index
    %c0_6 = arith.constant 0 : index
    %9 = vector.load %arg5[%c0_5, %c0_6] : memref<1x1024xf32, #tpu.memory_space<vmem>>, vector<1x1024xf32>
    tpu.vector_store %arg5[%c0_5, %c0_6], %8 {strides = array<i32>} : memref<1x1024xf32, #tpu.memory_space<vmem>>, vector<1x1024xf32>,
    %c0_7 = arith.constant 0 : index
    %c0_8 = arith.constant 0 : index
    %10 = vector.load %arg3[%c0_7, %c0_8] : memref<1x1024xf32, #tpu.memory_space<vmem>>, vector<1x1024xf32>
    %cst_9 = arith.constant 7.500000e-01 : f32
    %11 = vector.broadcast %cst_9 : f32 to vector<1x1024xf32>
    %12 = arith.mulf %11, %10 : vector<1x1024xf32>
    %c0_10 = arith.constant 0 : index
    %c0_11 = arith.constant 0 : index
    %13 = vector.load %arg4[%c0_10, %c0_11] : memref<1x1024xf32, #tpu.memory_space<vmem>>, vector<1x1024xf32>
    %cst_12 = arith.constant 2.500000e-01 : f32
    %14 = vector.broadcast %cst_12 : f32 to vector<1x1024xf32>
    %15 = arith.mulf %14, %13 : vector<1x1024xf32>
    %16 = arith.subf %12, %15 : vector<1x1024xf32>
    %cst_13 = arith.constant 5.000000e-01 : f32
    %17 = vector.broadcast %cst_13 : f32 to vector<1x1024xf32>
    %18 = arith.mulf %17, %16 : vector<1x1024xf32>
    %c0_14 = arith.constant 0 : index
    %c0_15 = arith.constant 0 : index
    %19 = vector.load %arg6[%c0_14, %c0_15] : memref<1x1024xf32, #tpu.memory_space<vmem>>, vector<1x1024xf32>
    tpu.vector_store %arg6[%c0_14, %c0_15], %18 {strides = array<i32>} : memref<1x1024xf32, #tpu.memory_space<vmem>>, vector<1x1024xf32>,
    return
  }
  func.func @transform_0(%arg0: i32) -> (i32, i32) {
    %c0_i32 = arith.constant 0 : i32
    %c0_i32_0 = arith.constant 0 : i32
    return %arg0, %c0_i32 : i32, i32
  }
  func.func @transform_1(%arg0: i32) -> (i32, i32) {
    %c0_i32 = arith.constant 0 : i32
    %c0_i32_0 = arith.constant 0 : i32
    return %arg0, %c0_i32 : i32, i32
  }
  func.func @transform_2(%arg0: i32) -> (i32, i32) {
    %c0_i32 = arith.constant 0 : i32
    %c0_i32_0 = arith.constant 0 : i32
    return %arg0, %c0_i32 : i32, i32
  }
  func.func @transform_3(%arg0: i32) -> (i32, i32) {
    %c0_i32 = arith.constant 0 : i32
    %c0_i32_0 = arith.constant 0 : i32
    return %arg0, %c0_i32 : i32, i32
  }
  func.func @transform_4(%arg0: i32) -> (i32, i32) {
    %c0_i32 = arith.constant 0 : i32
    %c0_i32_0 = arith.constant 0 : i32
    return %arg0, %c0_i32 : i32, i32
  }
  func.func @transform_5(%arg0: i32) -> (i32, i32) {
    %c0_i32 = arith.constant 0 : i32
    %c0_i32_0 = arith.constant 0 : i32
    return %arg0, %c0_i32 : i32, i32
  }
}

</mosaic_0001>

<llo_original>
// kernel: tpu_custom_call.1
$region0: #{tpu_custom_call.1}
  #allocation0 [shape = 'u32[]', space=smem, size = 0x4, offset = 0x4, fixed_abs, tag = 'smem constant byte address 0x4 - core index']
  #allocation1 [shape = 'u32[144,128]{1,0:T(1,128)}', space=vmem, size = 0x12000, scoped, tag = 'internal scratch']
  %s0 = inlined_call_operand.vmem [shape: f32[1,1024], index: 0, kind: input, shape index: {}]
  %s1 = inlined_call_operand.hbm [shape: f32[1,1024], index: 1, kind: input, shape index: {}, may-alias: {1,4}]
  %s2 = inlined_call_operand.hbm [shape: f32[1,1024], index: 2, kind: input, shape index: {}, may-alias: {2,5}]
  %s3 = inlined_call_operand.vmem [shape: f32[1,1024], index: 3, kind: input, shape index: {}]
  %s4 = inlined_call_operand.hbm [shape: f32[1,1024], index: 4, kind: output, shape index: {0}, may-alias: {1,4}]
  %s5 = inlined_call_operand.hbm [shape: f32[1,1024], index: 5, kind: output, shape index: {1}, may-alias: {2,5}]
  %6 = xla_tuple %s4, %s5
  %s7 = sld [smem:[#allocation0]]
  $region42: #{tpu_custom_call.1} parent=0
    _
  %s9 = ssub.s32 1, %s7
  %s10 = scalar_select 0, %s9, %s7
  $region1: #{tpu_custom_call.1} parent=0
    #allocation2 [shape = 'u8[4096]{0}', space=vmem, size = 0x1000, scoped, tag = 'input window, operand 1, single buffered']
    #allocation3 [shape = 's32[1]{0}', space=sflag, size = 0x4, scoped, tag = 'scoped memory for tpu_custom_call.1']
    #allocation4 [shape = 's32[1]{0}', space=sflag, size = 0x4, scoped, tag = 'scoped memory for tpu_custom_call.1']
    #allocation5 [shape = 'u8[4096]{0}', space=vmem, size = 0x1000, scoped, tag = 'input window, operand 2, single buffered']
    #allocation6 [shape = 's32[1]{0}', space=sflag, size = 0x4, scoped, tag = 'scoped memory for tpu_custom_call.1']
    #allocation7 [shape = 'u8[4096]{0}', space=vmem, size = 0x1000, scoped, tag = 'output window, operand 0, single buffered']
    #allocation8 [shape = 'u8[4096]{0}', space=vmem, size = 0x1000, scoped, tag = 'output window, operand 1, single buffered']
    #allocation9 [shape = 's32[1]{0}', space=sflag, size = 0x4, scoped, tag = 'scoped memory for tpu_custom_call.1']
    %11 = vsyncpa [#allocation3], 0
    %12 = vsyncpa [#allocation6], 0
    %13 = vsyncpa [#allocation4], 0
    %14 = vsyncpa [#allocation9], 0
    // Predicated region
    $region2: #{tpu_custom_call.1} parent=1 // pred_check
      _
    $region3: #{tpu_custom_call.1} parent=1 // pred_check_branch
      %16 = sbr.rel (0) target = $region5
    $region4: #{tpu_custom_call.1} parent=1 // pred_region
      _
    $region5: #{tpu_custom_call.1} parent=1 // pred_fallthru
      _
    // Predicated region
    $region6: #{tpu_custom_call.1} parent=1 // pred_check
      _
    $region7: #{tpu_custom_call.1} parent=1 // pred_check_branch
      %18 = sbr.rel (0) target = $region9
    $region8: #{tpu_custom_call.1} parent=1 // pred_region
      %s20 = ssub.s32 128, 128
      %21 = vsyncadd [#allocation3], %s20
      %s23 = sshll.u32 [#allocation2], 4
      %s24 = int_to_ptr.vmem [resolvable:$true] %s23
      %26 = dma.hbm_to_vmem [thread:$0]  %s1, 128, %s24, [#allocation3]
    $region9: #{tpu_custom_call.1} parent=1 // pred_fallthru
      _
    // Predicated region
    $region10: #{tpu_custom_call.1} parent=1 // pred_check
      _
    $region11: #{tpu_custom_call.1} parent=1 // pred_check_branch
      %28 = sbr.rel (0) target = $region13
    $region12: #{tpu_custom_call.1} parent=1 // pred_region
      %s30 = ssub.s32 128, 128
      %31 = vsyncadd [#allocation6], %s30
      %s33 = sshll.u32 [#allocation5], 4
      %s34 = int_to_ptr.vmem [resolvable:$true] %s33
      %36 = dma.hbm_to_vmem [thread:$0]  %s2, 128, %s34, [#allocation6]
    $region13: #{tpu_custom_call.1} parent=1 // pred_fallthru
      _
    // Predicated region
    $region14: #{tpu_custom_call.1} parent=1 // pred_check
      _
    $region15: #{tpu_custom_call.1} parent=1 // pred_check_branch
      %38 = sbr.rel (0) target = $region17
    $region16: #{tpu_custom_call.1} parent=1 // pred_region
      _
    $region17: #{tpu_custom_call.1} parent=1 // pred_fallthru
      _
    // Predicated region
    $region18: #{tpu_custom_call.1} parent=1 // pred_check
      _
    $region19: #{tpu_custom_call.1} parent=1 // pred_check_branch
      %40 = sbr.rel (0) target = $region21
    $region20: #{tpu_custom_call.1} parent=1 // pred_region
      %41 = dma.done [#allocation3], 128
    $region21: #{tpu_custom_call.1} parent=1 // pred_fallthru
      _
    // Predicated region
    $region22: #{tpu_custom_call.1} parent=1 // pred_check
      _
    $region23: #{tpu_custom_call.1} parent=1 // pred_check_branch
      %43 = sbr.rel (0) target = $region25
    $region24: #{tpu_custom_call.1} parent=1 // pred_region
      %44 = dma.done [#allocation6], 128
    $region25: #{tpu_custom_call.1} parent=1 // pred_fallthru
      _
    %v45 = vld [vmem:[#allocation2] sm:$0xff]
    %v46 = vmul.f32 %v45, 0.75
    %v47 = vld [vmem:[%s0] sm:$0xff]
    %v48 = vmul.f32 %v47, 0.25
    %v49 = vsub.f32 %v46, %v48
    %v50 = vmul.f32 %v49, 0.5
    %51 = vst [vmem:[#allocation7] sm:$0xff] %v50
    %v52 = vld [vmem:[#allocation5] sm:$0xff]
    %v53 = vmul.f32 %v52, 0.75
    %v54 = vld [vmem:[%s3] sm:$0xff]
    %v55 = vmul.f32 %v54, 0.25
    %v56 = vsub.f32 %v53, %v55
    %v57 = vmul.f32 %v56, 0.5
    %58 = vst [vmem:[#allocation8] sm:$0xff] %v57
    // Predicated region
    $region26: #{tpu_custom_call.1} parent=1 // pred_check
      _
    $region27: #{tpu_custom_call.1} parent=1 // pred_check_branch
      %60 = sbr.rel (0) target = $region29
    $region28: #{tpu_custom_call.1} parent=1 // pred_region
      %s62 = ssub.s32 128, 128
      %63 = vsyncadd [#allocation4], %s62
      %s65 = sshll.u32 [#allocation7], 4
      %s66 = int_to_ptr.vmem [resolvable:$true] %s65
      %68 = dma.vmem_to_hbm [thread:$0]  %s66, 128, %s4, [#allocation4]
    $region29: #{tpu_custom_call.1} parent=1 // pred_fallthru
      _
    // Predicated region
    $region30: #{tpu_custom_call.1} parent=1 // pred_check
      _
    $region31: #{tpu_custom_call.1} parent=1 // pred_check_branch
      %70 = sbr.rel (0) target = $region33
    $region32: #{tpu_custom_call.1} parent=1 // pred_region
      %s72 = ssub.s32 128, 128
      %73 = vsyncadd [#allocation9], %s72
      %s75 = sshll.u32 [#allocation8], 4
      %s76 = int_to_ptr.vmem [resolvable:$true] %s75
      %78 = dma.vmem_to_hbm [thread:$0]  %s76, 128, %s5, [#allocation9]
    $region33: #{tpu_custom_call.1} parent=1 // pred_fallthru
      _
    // Predicated region
    $region34: #{tpu_custom_call.1} parent=1 // pred_check
      _
    $region35: #{tpu_custom_call.1} parent=1 // pred_check_branch
      %80 = sbr.rel (0) target = $region37
    $region36: #{tpu_custom_call.1} parent=1 // pred_region
      %81 = dma.done [#allocation4], 128
    $region37: #{tpu_custom_call.1} parent=1 // pred_fallthru
      _
    // Predicated region
    $region38: #{tpu_custom_call.1} parent=1 // pred_check
      _
    $region39: #{tpu_custom_call.1} parent=1 // pred_check_branch
      %83 = sbr.rel (0) target = $region41
    $region40: #{tpu_custom_call.1} parent=1 // pred_region
      %84 = dma.done [#allocation9], 128
    $region41: #{tpu_custom_call.1} parent=1 // pred_fallthru
      _
    %85 = vsyncpa [#allocation3], 1
    %86 = vsyncpa [#allocation6], 1
    %87 = vsyncpa [#allocation4], 1
    %88 = vsyncpa [#allocation9], 1

</llo_original>
